<compile_context>
chip_gen: v6e
topology: v6e:2x2x1
jax: 0.10.0
libtpu: 0.0.40
codegen_flags: <defaults>
</compile_context>

<pallas_src>
import jax
import jax.numpy as jnp
from jax.experimental import pallas as pl
from jax.experimental.pallas import tpu as pltpu

_LANE = 128
_SUBLANE = 8
_MAX_ROW_TILE = 512
_VMEM_LIMIT_BYTES = 48 * 1024 * 1024  # fits v7x's 64 MiB physical VMEM with headroom


def _round_up(n, m):
    return ((n + m - 1) // m) * m


def _choose_row_tile(S, Din, Dp, itemsize):
    """Rows per grid step: multiple of 8, <=512, and VMEM-budgeted for v7x."""
    budget = _VMEM_LIMIT_BYTES - 8 * 1024 * 1024          # headroom for W + misc
    w_bytes = Din * Dp * itemsize                          # resident, double-buffered
    per_row = 2 * (Din + Dp) * itemsize                    # double-buffered x + out tiles
    max_rows = max(_SUBLANE, (budget - 2 * w_bytes) // max(per_row, 1))
    ts = min(_MAX_ROW_TILE, S, max_rows)
    return max(_SUBLANE, (ts // _SUBLANE) * _SUBLANE)


def _concat_squash_kernel(x_ref, w_ref, gate_ref, fbias_ref, o_ref):
    """One grid step = one (batch, row-tile) slab.

    x_ref:     (1, TS, Din)  row tile of this batch element
    w_ref:     (Din, Dp)     main linear weight (feature dim lane-padded to 128k)
    gate_ref:  (1, 1, Dp)    sigmoid(ctx @ Wg + bg) for this batch element
    fbias_ref: (1, 1, Dp)    ctx @ Wb + b * gate    for this batch element
    o_ref:     (1, TS, Dp)
    """
    y = jnp.dot(x_ref[0], w_ref[...], preferred_element_type=jnp.float32)  # (TS, Dp)
    o_ref[0] = (y * gate_ref[0] + fbias_ref[0]).astype(o_ref.dtype)


@jax.jit
def concat_squash_linear(context, x, w, b, wg, bg, wb):
    """Pallas-backed ConcatSquashLinear.forward(context, x).

    context: (B, 1+dim_c)
    x:       (B, S, dim_in) or (B, dim_in)
    w:  (dim_in, dim_out)   b:  (dim_out,)      -> _layer (weight transposed)
    wg: (1+dim_c, dim_out)  bg: (dim_out,)      -> _hyper_gate
    wb: (1+dim_c, dim_out)                      -> _hyper_bias (no bias)
    """
    squeeze = x.ndim == 2
    if squeeze:
        x = x[:, None, :]
    B, S, Din = x.shape
    Dout = w.shape[1]

    # ---- hyper-network: batch-constant tiny matmuls, hoisted out of the Pallas grid.
    # Fold the main-layer bias:  (xW + b)*g + cb  ==  (xW)*g + (b*g + cb)
    gate = jax.nn.sigmoid(context @ wg + bg)            # (B, Dout)
    fbias = context @ wb + b[None, :] * gate            # (B, Dout)

    # ---- lane-dense output: pad feature dim to a multiple of 128 (unmasked vst).
    Dp = _round_up(Dout, _LANE)
    if Dp != Dout:
        w_p = jnp.pad(w, ((0, 0), (0, Dp - Dout)))
        gate_p = jnp.pad(gate, ((0, 0), (0, Dp - Dout)))
        fbias_p = jnp.pad(fbias, ((0, 0), (0, Dp - Dout)))
    else:
        w_p, gate_p, fbias_p = w, gate, fbias

    # ---- row tiling over the sequence axis (big tiles amortize per-step overhead).
    itemsize = jnp.dtype(x.dtype).itemsize
    TS = _choose_row_tile(S, Din, Dp, itemsize)
    Sp = _round_up(S, TS)
    x_p = jnp.pad(x, ((0, 0), (0, Sp - S), (0, 0))) if Sp != S else x

    out = pl.pallas_call(
        _concat_squash_kernel,
        out_shape=jax.ShapeDtypeStruct((B, Sp, Dp), x.dtype),
        grid_spec=pltpu.PrefetchScalarGridSpec(
            num_scalar_prefetch=0,
            grid=(B, Sp // TS),
            in_specs=[
                pl.BlockSpec((1, TS, Din), lambda bi, si: (bi, si, 0)),  # x row tile
                pl.BlockSpec((Din, Dp), lambda bi, si: (0, 0)),          # W (resident)
                pl.BlockSpec((1, 1, Dp), lambda bi, si: (bi, 0, 0)),     # gate (per-batch)
                pl.BlockSpec((1, 1, Dp), lambda bi, si: (bi, 0, 0)),     # fused bias (per-batch)
            ],
            out_specs=pl.BlockSpec((1, TS, Dp), lambda bi, si: (bi, si, 0)),
        ),
        compiler_params=pltpu.CompilerParams(
            dimension_semantics=("parallel", "parallel"),
            vmem_limit_bytes=_VMEM_LIMIT_BYTES,
        ),
    )(x_p, w_p, gate_p[:, None, :], fbias_p[:, None, :])

    out = out[:, :S, :Dout]
    if squeeze:
        out = out[:, 0, :]
    return out


def _reference(context, x, w, b, wg, bg, wb):
    gate = jax.nn.sigmoid(context @ wg + bg)  # (B, Dout)
    bias = context @ wb                       # (B, Dout)
    y = x @ w + b
    if x.ndim == 3:
        gate = gate[:, None, :]
        bias = bias[:, None, :]
    return y * gate + bias


if __name__ == "__main__":
    # Module hyperparameters (small, consistent with the PyTorch __init__)
    dim_in, dim_out, dim_c = 32, 32, 1
    C = 1 + dim_c
    B, S = 2, 8

    key = jax.random.PRNGKey(0)
    k = jax.random.split(key, 8)

    def uinit(kk, shape, fan_in):
        bound = 1.0 / jnp.sqrt(fan_in)
        return jax.random.uniform(kk, shape, jnp.float32, -bound, bound)

    # Parameters (shapes match nn.Linear, stored transposed (in, out)).
    w = uinit(k[0], (dim_in, dim_out), dim_in)      # _layer.weight^T
    b = uinit(k[1], (dim_out,), dim_in)             # _layer.bias
    wg = uinit(k[2], (C, dim_out), C)               # _hyper_gate.weight^T
    bg = uinit(k[3], (dim_out,), C)                 # _hyper_gate.bias
    wb = uinit(k[4], (C, dim_out), C)               # _hyper_bias.weight^T (no bias)

    # --- 3-D x (batch, seq, dim_in) ---
    x = jax.random.normal(k[5], (B, S, dim_in), jnp.float32)
    context = jax.random.normal(k[6], (B, C), jnp.float32)

    out = jax.block_until_ready(concat_squash_linear(context, x, w, b, wg, bg, wb))
    ref = _reference(context, x, w, b, wg, bg, wb)
    assert out.shape == (B, S, dim_out)
    assert jnp.allclose(out, ref, atol=1e-5, rtol=1e-5), "mismatch (3-D path)"

    # --- 2-D x (batch, dim_in), the x.dim() == 2 branch of the PyTorch forward ---
    x2 = jax.random.normal(k[7], (B, dim_in), jnp.float32)
    out2 = jax.block_until_ready(concat_squash_linear(context, x2, w, b, wg, bg, wb))
    ref2 = _reference(context, x2, w, b, wg, bg, wb)
    assert out2.shape == (B, dim_out)
    assert jnp.allclose(out2, ref2, atol=1e-5, rtol=1e-5), "mismatch (2-D path)"

    # --- exercise the lane-padding / seq-padding paths (Dout not a multiple of 128) ---
    di3, do3, S3 = 48, 200, 40
    kk = jax.random.split(jax.random.PRNGKey(1), 8)
    w3 = uinit(kk[0], (di3, do3), di3)
    b3 = uinit(kk[1], (do3,), di3)
    wg3 = uinit(kk[2], (C, do3), C)
    bg3 = uinit(kk[3], (do3,), C)
    wb3 = uinit(kk[4], (C, do3), C)
    x3 = jax.random.normal(kk[5], (B, S3, di3), jnp.float32)
    c3 = jax.random.normal(kk[6], (B, C), jnp.float32)
    out3 = jax.block_until_ready(concat_squash_linear(c3, x3, w3, b3, wg3, bg3, wb3))
    ref3 = _reference(c3, x3, w3, b3, wg3, bg3, wb3)
    assert out3.shape == (B, S3, do3)
    assert jnp.allclose(out3, ref3, atol=1e-4, rtol=1e-4), "mismatch (padded path)"

    print("KERNEL_OK")
</pallas_src>

<mosaic_0001>
module attributes {stable_mosaic.version = 11 : i64} {
  func.func @_concat_squash_kernel(%arg0: i32, %arg1: i32, %arg2: memref<1x8x32xf32, #tpu.memory_space<vmem>>, %arg3: memref<32x128xf32, #tpu.memory_space<vmem>>, %arg4: memref<1x1x128xf32, #tpu.memory_space<vmem>>, %arg5: memref<1x1x128xf32, #tpu.memory_space<vmem>>, %arg6: memref<1x8x128xf32, #tpu.memory_space<vmem>>) attributes {dimension_semantics = [#tpu.dimension_semantics<parallel>, #tpu.dimension_semantics<parallel>], iteration_bounds = array<i64: 2, 1>, scalar_prefetch = 0 : i64, scratch_operands = 0 : i64, tpu.core_type = #tpu.core_type<tc>, window_params = [{transform_indices = @transform_0, window_bounds = array<i64: 1, 8, 32>}, {pipeline_mode = #tpu.pipeline_mode<synchronous>, transform_indices = @transform_1, window_bounds = array<i64: 32, 128>}, {transform_indices = @transform_2, window_bounds = array<i64: 1, 1, 128>}, {transform_indices = @transform_3, window_bounds = array<i64: 1, 1, 128>}, {transform_indices = @transform_4, window_bounds = array<i64: 1, 8, 128>}]} {
    %c0 = arith.constant 0 : index
    %c0_0 = arith.constant 0 : index
    %c0_1 = arith.constant 0 : index
    %0 = vector.load %arg2[%c0, %c0_0, %c0_1] : memref<1x8x32xf32, #tpu.memory_space<vmem>>, vector<1x8x32xf32>
    %1 = vector.shape_cast %0 : vector<1x8x32xf32> to vector<8x32xf32>
    %c0_2 = arith.constant 0 : index
    %c0_3 = arith.constant 0 : index
    %2 = vector.load %arg3[%c0_2, %c0_3] : memref<32x128xf32, #tpu.memory_space<vmem>>, vector<32x128xf32>
    %cst = arith.constant dense<0.000000e+00> : vector<8x128xf32>
    %3 = tpu.matmul %1, %2, %cst {dimension_numbers = #tpu.dot_dimension_numbers<[1], [0], [0], [1], [0, 0, 1, 1], [], []>} : vector<8x32xf32>, vector<32x128xf32>, vector<8x128xf32> -> vector<8x128xf32>
    %c0_4 = arith.constant 0 : index
    %c0_5 = arith.constant 0 : index
    %c0_6 = arith.constant 0 : index
    %4 = vector.load %arg4[%c0_4, %c0_5, %c0_6] : memref<1x1x128xf32, #tpu.memory_space<vmem>>, vector<1x1x128xf32>
    %5 = vector.shape_cast %4 : vector<1x1x128xf32> to vector<1x128xf32>
    %6 = vector.broadcast %5 : vector<1x128xf32> to vector<8x128xf32>
    %7 = arith.mulf %3, %6 : vector<8x128xf32>
    %c0_7 = arith.constant 0 : index
    %c0_8 = arith.constant 0 : index
    %c0_9 = arith.constant 0 : index
    %8 = vector.load %arg5[%c0_7, %c0_8, %c0_9] : memref<1x1x128xf32, #tpu.memory_space<vmem>>, vector<1x1x128xf32>
    %9 = vector.shape_cast %8 : vector<1x1x128xf32> to vector<1x128xf32>
    %10 = vector.broadcast %9 : vector<1x128xf32> to vector<8x128xf32>
    %11 = arith.addf %7, %10 : vector<8x128xf32>
    %c0_10 = arith.constant 0 : index
    %c0_11 = arith.constant 0 : index
    %c0_12 = arith.constant 0 : index
    %12 = vector.load %arg6[%c0_10, %c0_11, %c0_12] : memref<1x8x128xf32, #tpu.memory_space<vmem>>, vector<1x8x128xf32>
    %13 = vector.shape_cast %12 : vector<1x8x128xf32> to vector<8x128xf32>
    %14 = vector.shape_cast %11 : vector<8x128xf32> to vector<1x8x128xf32>
    tpu.vector_store %arg6[%c0_10, %c0_11, %c0_12], %14 {strides = array<i32>} : memref<1x8x128xf32, #tpu.memory_space<vmem>>, vector<1x8x128xf32>,
    return
  }
  func.func @transform_0(%arg0: i32, %arg1: i32) -> (i32, i32, i32) {
    %c0_i32 = arith.constant 0 : i32
    %c0_i32_0 = arith.constant 0 : i32
    return %arg0, %arg1, %c0_i32 : i32, i32, i32
  }
  func.func @transform_1(%arg0: i32, %arg1: i32) -> (i32, i32) {
    %c0_i32 = arith.constant 0 : i32
    %c0_i32_0 = arith.constant 0 : i32
    %c0_i32_1 = arith.constant 0 : i32
    return %c0_i32, %c0_i32_0 : i32, i32
  }
  func.func @transform_2(%arg0: i32, %arg1: i32) -> (i32, i32, i32) {
    %c0_i32 = arith.constant 0 : i32
    %c0_i32_0 = arith.constant 0 : i32
    %c0_i32_1 = arith.constant 0 : i32
    return %arg0, %c0_i32, %c0_i32_0 : i32, i32, i32
  }
  func.func @transform_3(%arg0: i32, %arg1: i32) -> (i32, i32, i32) {
    %c0_i32 = arith.constant 0 : i32
    %c0_i32_0 = arith.constant 0 : i32
    %c0_i32_1 = arith.constant 0 : i32
    return %arg0, %c0_i32, %c0_i32_0 : i32, i32, i32
  }
  func.func @transform_4(%arg0: i32, %arg1: i32) -> (i32, i32, i32) {
    %c0_i32 = arith.constant 0 : i32
    %c0_i32_0 = arith.constant 0 : i32
    return %arg0, %arg1, %c0_i32 : i32, i32, i32
  }
}

</mosaic_0001>

<llo_original>
// kernel: concat_squash_linear.1
$region0: #{concat_squash_linear.1}
  #allocation0 [shape = 'u32[]', space=smem, size = 0x4, offset = 0x4, fixed_abs, tag = 'smem constant byte address 0x4 - core index']
  #allocation1 [shape = 'u32[144,128]{1,0:T(1,128)}', space=vmem, size = 0x12000, scoped, tag = 'internal scratch']
  %s0 = inlined_call_operand.vmem [shape: f32[2,8,32], index: 0, kind: input, shape index: {}]
  %s1 = inlined_call_operand.vmem [shape: f32[32,128], index: 1, kind: input, shape index: {}]
  %s2 = inlined_call_operand.vmem [shape: f32[2,1,128], index: 2, kind: input, shape index: {}]
  %s3 = inlined_call_operand.vmem [shape: f32[2,1,128], index: 3, kind: input, shape index: {}]
  %s4 = inlined_call_operand.hbm [shape: f32[2,8,128], index: 4, kind: output, shape index: {}]
  %s5 = sld [smem:[#allocation0]]
  $region49: #{concat_squash_linear.1} parent=0
    _
  %s7 = ssub.s32 1, %s5
  %s8 = scalar_select 0, %s7, %s5
  $region1: #{concat_squash_linear.1} parent=0
    #allocation2 [shape = 'u8[8192]{0}', space=vmem, size = 0x2000, scoped, tag = 'output window, operand 0']
    #allocation3 [shape = 's32[2]{0}', space=sflag, size = 0x8, scoped, tag = 'scoped memory for concat_squash_linear.1']
    %9 = vsyncpa [#allocation3], 0
    %s10 = scalar_lea.sflag [#allocation3], 1
    %11 = vsyncpa %s10, 0
    loop: start=0, step=1, limit=4
    $region2: #{concat_squash_linear.1} parent=1 // loop_pre_header
      _
    $region3: #{concat_squash_linear.1} parent=1 // loop_header
      %s13 = sphi 0, %s17
      %p14 = scmp.ge.s32.totalorder %s13, 4
      %s20 = sphi 0, %s32
      %s21 = sphi 0, %s28
      %s22 = sphi 0, %s20
      %s23 = sphi 0, %s21
      %s24 = sphi 0, %s22
      %s25 = sphi 0, %s23
      %s37 = sphi 0, %s39
      %s40 = sphi 0, %s37
      %s41 = sphi 0, %s40
      %s57 = sphi 0, %s41
      %s61 = sphi 0, %s61
      %s63 = sphi 0, %s61
      %s64 = sphi 0, %s63
      %s78 = sphi 0, %s64
      %s84 = sphi 0, %s86
      %s87 = sphi 0, %s84
      %s88 = sphi 0, %s87
      %s104 = sphi 0, %s88
      %s110 = sphi 0, %s112
      %s113 = sphi 0, %s110
      %s114 = sphi 0, %s113
      %s130 = sphi 0, %s114
      %s138 = sphi 0, %s140
      %s141 = sphi 0, %s138
      %s142 = sphi 0, %s141
      %s158 = sphi 0, %s142
    $region4: #{concat_squash_linear.1} parent=1 // loop_header_branch
      %16 = sbr.rel (%p14) target = $region8
    $region5: #{concat_squash_linear.1} parent=1 // loop_body
      %s18 = ssub.s32 %s13, 1
      %s19 = ssub.s32 %s13, 2
      %s26 = sadd.s32 1, %s21
      %p27 = scmp.ge.s32.totalorder %s26, 1
      %s28 = scalar_select %p27, 0, %s26
      %s29 = sadd.s32 1, %s20
      %s30 = scalar_select %p27, %s29, %s20
      %p31 = scmp.ge.s32.totalorder %s30, 2
      %s32 = scalar_select %p31, 0, %s30
      %s33 = ssub.s32 %s20, %s32
      %s34 = ssub.s32 %s21, %s28
      %s35 = sor.u32 %s33, %s34
      %p36 = scmp.eq.s32.totalorder %s35, 0
      %s38 = sadd.s32 %s37, 1
      %s39 = scalar_select %p36, %s37, %s38
      %p42 = pneg %p36
      %p43 = scmp.eq.s32.totalorder %s13, 1
      %p44 = por %p42, %p43
      %p45 = scmp.ne.s32.totalorder %s37, %s40
      %p46 = scmp.eq.s32.totalorder %s13, 0
      %p47 = por %p45, %p46
      %p48 = scmp.ne.s32.totalorder %s37, %s40
      %p49 = scmp.eq.s32.totalorder %s18, 1
      %p50 = por %p48, %p49
      %p51 = scmp.ne.s32.totalorder %s40, %s41
      %p52 = scmp.eq.s32.totalorder %s18, 0
      %p53 = por %p51, %p52
      %p54 = scmp.ne.s32.totalorder %s40, %s41
      %p55 = scmp.eq.s32.totalorder %s19, 1
      %p56 = por %p54, %p55
      %p58 = scmp.ne.s32.totalorder %s41, %s57
      %p59 = scmp.eq.s32.totalorder %s19, 0
      %p60 = por %p58, %p59
      %s62 = sadd.s32 %s61, 1
      %p65 = scmp.eq.s32.totalorder %s13, 1
      %p66 = scmp.ne.s32.totalorder %s61, %s63
      %p67 = scmp.eq.s32.totalorder %s13, 0
      %p68 = por %p66, %p67
      %p69 = scmp.ne.s32.totalorder %s61, %s63
      %p70 = scmp.eq.s32.totalorder %s18, 1
      %p71 = por %p69, %p70
      %p72 = scmp.ne.s32.totalorder %s63, %s64
      %p73 = scmp.eq.s32.totalorder %s18, 0
      %p74 = por %p72, %p73
      %p75 = scmp.ne.s32.totalorder %s63, %s64
      %p76 = scmp.eq.s32.totalorder %s19, 1
      %p77 = por %p75, %p76
      %p79 = scmp.ne.s32.totalorder %s64, %s78
      %p80 = scmp.eq.s32.totalorder %s19, 0
      %p81 = por %p79, %p80
      %s82 = ssub.s32 %s20, %s32
      %p83 = scmp.eq.s32.totalorder %s82, 0
      %s85 = sadd.s32 %s84, 1
      %s86 = scalar_select %p83, %s84, %s85
      %p89 = pneg %p83
      %p90 = scmp.eq.s32.totalorder %s13, 1
      %p91 = por %p89, %p90
      %p92 = scmp.ne.s32.totalorder %s84, %s87
      %p93 = scmp.eq.s32.totalorder %s13, 0
      %p94 = por %p92, %p93
      %p95 = scmp.ne.s32.totalorder %s84, %s87
      %p96 = scmp.eq.s32.totalorder %s18, 1
      %p97 = por %p95, %p96
      %p98 = scmp.ne.s32.totalorder %s87, %s88
      %p99 = scmp.eq.s32.totalorder %s18, 0
      %p100 = por %p98, %p99
      %p101 = scmp.ne.s32.totalorder %s87, %s88
      %p102 = scmp.eq.s32.totalorder %s19, 1
      %p103 = por %p101, %p102
      %p105 = scmp.ne.s32.totalorder %s88, %s104
      %p106 = scmp.eq.s32.totalorder %s19, 0
      %p107 = por %p105, %p106
      %s108 = ssub.s32 %s20, %s32
      %p109 = scmp.eq.s32.totalorder %s108, 0
      %s111 = sadd.s32 %s110, 1
      %s112 = scalar_select %p109, %s110, %s111
      %p115 = pneg %p109
      %p116 = scmp.eq.s32.totalorder %s13, 1
      %p117 = por %p115, %p116
      %p118 = scmp.ne.s32.totalorder %s110, %s113
      %p119 = scmp.eq.s32.totalorder %s13, 0
      %p120 = por %p118, %p119
      %p121 = scmp.ne.s32.totalorder %s110, %s113
      %p122 = scmp.eq.s32.totalorder %s18, 1
      %p123 = por %p121, %p122
      %p124 = scmp.ne.s32.totalorder %s113, %s114
      %p125 = scmp.eq.s32.totalorder %s18, 0
      %p126 = por %p124, %p125
      %p127 = scmp.ne.s32.totalorder %s113, %s114
      %p128 = scmp.eq.s32.totalorder %s19, 1
      %p129 = por %p127, %p128
      %p131 = scmp.ne.s32.totalorder %s114, %s130
      %p132 = scmp.eq.s32.totalorder %s19, 0
      %p133 = por %p131, %p132
      %s134 = ssub.s32 %s20, %s32
      %s135 = ssub.s32 %s21, %s28
      %s136 = sor.u32 %s134, %s135
      %p137 = scmp.eq.s32.totalorder %s136, 0
      %s139 = sadd.s32 %s138, 1
      %s140 = scalar_select %p137, %s138, %s139
      %p143 = pneg %p137
      %p144 = scmp.eq.s32.totalorder %s13, 1
      %p145 = por %p143, %p144
      %p146 = scmp.ne.s32.totalorder %s138, %s141
      %p147 = scmp.eq.s32.totalorder %s13, 0
      %p148 = por %p146, %p147
      %p149 = scmp.ne.s32.totalorder %s138, %s141
      %p150 = scmp.eq.s32.totalorder %s18, 1
      %p151 = por %p149, %p150
      %p152 = scmp.ne.s32.totalorder %s141, %s142
      %p153 = scmp.eq.s32.totalorder %s18, 0
      %p154 = por %p152, %p153
      %p155 = scmp.ne.s32.totalorder %s141, %s142
      %p156 = scmp.eq.s32.totalorder %s19, 1
      %p157 = por %p155, %p156
      %p159 = scmp.ne.s32.totalorder %s142, %s158
      %p160 = scmp.eq.s32.totalorder %s19, 0
      %p161 = por %p159, %p160
      %p162 = scmp.le.s32.totalorder 1, %s13
      %p163 = scmp.lt.s32.totalorder %s13, 3
      %p164 = pnand %p162, %p163
      %p165 = pneg %p164
      // Predicated region
      $region9: #{concat_squash_linear.1} parent=5 // pred_check
        _
      $region10: #{concat_squash_linear.1} parent=5 // pred_check_branch
        %167 = sbr.rel (%p164) target = $region12
      $region11: #{concat_squash_linear.1} parent=5 // pred_region
        %s168 = ssub.s32 %s13, 1
        // Predicated region
        $region13: #{concat_squash_linear.1} parent=11 // pred_check
          %p169 = pneg %p74
        $region14: #{concat_squash_linear.1} parent=11 // pred_check_branch
          %171 = sbr.rel (%p169) target = $region16
        $region15: #{concat_squash_linear.1} parent=11 // pred_region
          _
        $region16: #{concat_squash_linear.1} parent=11 // pred_fallthru
          _
      $region12: #{concat_squash_linear.1} parent=5 // pred_fallthru
        _
      %p172 = scmp.lt.s32.totalorder %s13, 2
      // Predicated region
      $region17: #{concat_squash_linear.1} parent=5 // pred_check
        %p173 = pneg %p172
      $region18: #{concat_squash_linear.1} parent=5 // pred_check_branch
        %175 = sbr.rel (%p173) target = $region20
      $region19: #{concat_squash_linear.1} parent=5 // pred_region
        // Predicated region
        $region21: #{concat_squash_linear.1} parent=19 // pred_check
          %p176 = pneg %p47
        $region22: #{concat_squash_linear.1} parent=19 // pred_check_branch
          %178 = sbr.rel (%p176) target = $region24
        $region23: #{concat_squash_linear.1} parent=19 // pred_region
          %p179 = scmp.lt.s32.totalorder %s20, 1
          %s180 = scalar_select %p179, %s20, 1
          %p181 = scmp.lt.s32.totalorder %s21, 0
          %s182 = scalar_select %p181, %s21, 0
          %s183 = sadd.s32 %s182, %s180
          %s184 = smul.addr %s183, 8
          %s185 = scalar_lea.vmem %s0, %s184
        $region24: #{concat_squash_linear.1} parent=19 // pred_fallthru
          _
        // Predicated region
        $region25: #{concat_squash_linear.1} parent=19 // pred_check
          %p186 = pneg %p94
        $region26: #{concat_squash_linear.1} parent=19 // pred_check_branch
          %188 = sbr.rel (%p186) target = $region28
        $region27: #{concat_squash_linear.1} parent=19 // pred_region
          %p189 = scmp.lt.s32.totalorder %s20, 1
          %s190 = scalar_select %p189, %s20, 1
          %s191 = scalar_lea.vmem %s2, %s190
        $region28: #{concat_squash_linear.1} parent=19 // pred_fallthru
          _
        // Predicated region
        $region29: #{concat_squash_linear.1} parent=19 // pred_check
          %p192 = pneg %p120
        $region30: #{concat_squash_linear.1} parent=19 // pred_check_branch
          %194 = sbr.rel (%p192) target = $region32
        $region31: #{concat_squash_linear.1} parent=19 // pred_region
          %p195 = scmp.lt.s32.totalorder %s20, 1
          %s196 = scalar_select %p195, %s20, 1
          %s197 = scalar_lea.vmem %s3, %s196
        $region32: #{concat_squash_linear.1} parent=19 // pred_fallthru
          _
      $region20: #{concat_squash_linear.1} parent=5 // pred_fallthru
        _
      %p198 = scmp.le.s32.totalorder 1, %s13
      %p199 = scmp.lt.s32.totalorder %s13, 3
      %p200 = pnand %p198, %p199
      %p201 = pneg %p200
      // Predicated region
      $region33: #{concat_squash_linear.1} parent=5 // pred_check
        _
      $region34: #{concat_squash_linear.1} parent=5 // pred_check_branch
        %203 = sbr.rel (%p200) target = $region36
      $region35: #{concat_squash_linear.1} parent=5 // pred_region
        %s204 = ssub.s32 %s13, 1
        %p205 = scmp.lt.s32.totalorder %s22, 1
        %s206 = scalar_select %p205, %s22, 1
        %p207 = scmp.lt.s32.totalorder %s23, 0
        %s208 = scalar_select %p207, %s23, 0
        %s209 = sadd.s32 %s208, %s206
        %s210 = smul.addr %s209, 8
        %s211 = scalar_lea.vmem %s0, %s210
        %p212 = pneg %p53
        %p213 = pneg %p50
        %p214 = pneg %p74
        %p215 = pneg %p71
        %p216 = scmp.lt.s32.totalorder %s22, 1
        %s217 = scalar_select %p216, %s22, 1
        %s218 = scalar_lea.vmem %s2, %s217
        %p219 = pneg %p100
        %p220 = pneg %p97
        %p221 = scmp.lt.s32.totalorder %s22, 1
        %s222 = scalar_select %p221, %s22, 1
        %s223 = scalar_lea.vmem %s3, %s222
        %p224 = pneg %p126
        %p225 = pneg %p123
        %p226 = pneg %p154
        %p227 = pneg %p151
        %s228 = sand.u32 %s141, 1
        %s229 = scalar_lea.sflag [#allocation3], %s228
        %s230 = sand.u32 %s141, 1
        %s231 = smul.addr %s230, 8
        %s232 = scalar_lea.vmem [#allocation2], %s231
        %p233 = scmp.lt.s32.totalorder %s22, 1
        %s234 = scalar_select %p233, %s22, 1
        %p235 = scmp.lt.s32.totalorder %s23, 0
        %s236 = scalar_select %p235, %s23, 0
        %s237 = sadd.s32 %s236, %s234
        %s238 = smul.addr %s237, 8
        %s239 = scalar_lea.vmem %s0, %s238
        %p240 = scmp.lt.s32.totalorder %s22, 1
        %s241 = scalar_select %p240, %s22, 1
        %s242 = scalar_lea.vmem %s2, %s241
        %p243 = scmp.lt.s32.totalorder %s22, 1
        %s244 = scalar_select %p243, %s22, 1
        %s245 = scalar_lea.vmem %s3, %s244
        %v246 = vld [vmem:[%s239] sm:$0xff]
        %v247 = vld [vmem:[%s1] sm:$0xff]
        %v248 = vld [vmem:[%s1 + $0x8] sm:$0xff]
        %v249 = vld [vmem:[%s1 + $0x10] sm:$0xff]
        %v250 = vld [vmem:[%s1 + $0x18] sm:$0xff]
        %vm251 = vcmask 261120
        %v253 = vsel %vm251, %v246, 0
        %255 = vmatprep.subr.mxu0 0.0
        %256 = vmatpush1.msra.mxu0 0.0
        %257 = vmatprep.subr.mxu0 0.0
        %258 = vmatpush1.msra.mxu0 0.0
        %259 = vmatprep.subr.mxu0 0.0
        %260 = vmatpush1.msra.mxu0 0.0
        %261 = vmatprep.subr.mxu0 0.0
        %262 = vmatpush1.msra.mxu0 0.0
        %263 = vmatprep.subr.mxu0 0.0
        %264 = vmatpush1.msra.mxu0 0.0
        %265 = vmatprep.subr.mxu0 0.0
        %266 = vmatpush1.msra.mxu0 0.0
        %267 = vmatprep.subr.mxu0 0.0
        %268 = vmatpush1.msra.mxu0 0.0
        %269 = vmatprep.subr.mxu0 0.0
        %270 = vmatpush1.msra.mxu0 0.0
        %271 = vmatprep.subr.mxu0 0.0
        %272 = vmatpush1.msra.mxu0 0.0
        %273 = vmatprep.subr.mxu0 0.0
        %274 = vmatpush1.msra.mxu0 0.0
        %275 = vmatprep.subr.mxu0 0.0
        %276 = vmatpush1.msra.mxu0 0.0
        %277 = vmatprep.subr.mxu0 0.0
        %278 = vmatpush1.msra.mxu0 0.0
        %279 = vmatprep.subr.mxu0 0.0
        %280 = vmatpush1.msra.mxu0 %v250
        %281 = vmatprep.subr.mxu0 0.0
        %282 = vmatpush1.msra.mxu0 %v249
        %283 = vmatprep.subr.mxu0 0.0
        %284 = vmatpush1.msra.mxu0 %v248
        %285 = vmatprep.subr.mxu0 0.0
        %286 = vmatpush1.msra.mxu0 %v247
        %287 = vmatprep.subr.mxu0 0.0
        %288 = vmatpush2.msra.mxu0 0.0
        %289 = vmatprep.subr.mxu0 0.0
        %290 = vmatpush2.msra.mxu0 0.0
        %291 = vmatprep.subr.mxu0 0.0
        %292 = vmatpush2.msra.mxu0 0.0
        %293 = vmatprep.subr.mxu0 0.0
        %294 = vmatpush2.msra.mxu0 0.0
        %295 = vmatprep.subr.mxu0 0.0
        %296 = vmatpush2.msra.mxu0 0.0
        %297 = vmatprep.subr.mxu0 0.0
        %298 = vmatpush2.msra.mxu0 0.0
        %299 = vmatprep.subr.mxu0 0.0
        %300 = vmatpush2.msra.mxu0 0.0
        %301 = vmatprep.subr.mxu0 0.0
        %302 = vmatpush2.msra.mxu0 0.0
        %303 = vmatprep.subr.mxu0 0.0
        %304 = vmatpush2.msra.mxu0 0.0
        %305 = vmatprep.subr.mxu0 0.0
        %306 = vmatpush2.msra.mxu0 0.0
        %307 = vmatprep.subr.mxu0 0.0
        %308 = vmatpush2.msra.mxu0 0.0
        %309 = vmatprep.subr.mxu0 0.0
        %310 = vmatpush2.msra.mxu0 0.0
        %311 = vmatprep.subr.mxu0 0.0
        %312 = vmatpush2.msra.mxu0 0.0
        %313 = vmatprep.subr.mxu0 0.0
        %314 = vmatpush2.msra.mxu0 0.0
        %315 = vmatprep.subr.mxu0 0.0
        %316 = vmatpush2.msra.mxu0 0.0
        %317 = vmatprep.subr.mxu0 0.0
        %318 = vmatpush2.msra.mxu0 0.0
        %319 = vmatprep.mubr.f32.mxu0 0.0
        %320 = vmatmul.mubr.f32.gmra.mxu0 %v253
        %v321 = vpop.f32.mrf.mxu0
        %v322 = vadd.f32 0.0, %v321
        %v323 = vpop.f32.mrf.mxu0
        %324 = vdwg.mxu0
        %v325 = vld [vmem:[%s242] sm:$0x1]
        %v327 = vlaneseq
        %v328 = vshrl.u32 %v327, 7
        %v329 = vsub.s32 0, %v328
        %v330 = vrot.slane %v325, %v329
        %v332 = vmul.f32 %v322, %v330
        %v333 = vld [vmem:[%s245] sm:$0x1]
        %v335 = vlaneseq
        %v336 = vshrl.u32 %v335, 7
        %v337 = vsub.s32 0, %v336
        %v338 = vrot.slane %v333, %v337
        %v340 = vadd.f32 %v332, %v338
        %341 = vst [vmem:[%s232] sm:$0xff] %v340
        %s342 = sand.u32 %s141, 1
        %s343 = scalar_lea.sflag [#allocation3], %s342
        %s344 = sand.u32 %s141, 1
        %s345 = smul.addr %s344, 8
        %s346 = scalar_lea.vmem [#allocation2], %s345
        // Predicated region
        $region37: #{concat_squash_linear.1} parent=35 // pred_check
          %p347 = pneg %p151
        $region38: #{concat_squash_linear.1} parent=35 // pred_check_branch
          %349 = sbr.rel (%p347) target = $region40
        $region39: #{concat_squash_linear.1} parent=35 // pred_region
          %s351 = ssub.s32 128, 128
          %352 = vsyncadd %s343, %s351
          %s353 = sadd.s32 %s23, %s22
          %s354 = smul.addr %s353, 128
          %s355 = scalar_lea.hbm %s4, %s354
          %s357 = sshll.u32 %s346, 4
          %s358 = int_to_ptr.vmem [resolvable:$true] %s357
          %360 = dma.vmem_to_hbm [thread:$0]  %s358, 128, %s355, %s343
        $region40: #{concat_squash_linear.1} parent=35 // pred_fallthru
          _
      $region36: #{concat_squash_linear.1} parent=5 // pred_fallthru
        _
      %p361 = scmp.le.s32.totalorder 2, %s13
      // Predicated region
      $region41: #{concat_squash_linear.1} parent=5 // pred_check
        %p362 = pneg %p361
      $region42: #{concat_squash_linear.1} parent=5 // pred_check_branch
        %364 = sbr.rel (%p362) target = $region44
      $region43: #{concat_squash_linear.1} parent=5 // pred_region
        %s365 = ssub.s32 %s13, 2
        // Predicated region
        $region45: #{concat_squash_linear.1} parent=43 // pred_check
          %p366 = pneg %p157
        $region46: #{concat_squash_linear.1} parent=43 // pred_check_branch
          %368 = sbr.rel (%p366) target = $region48
        $region47: #{concat_squash_linear.1} parent=43 // pred_region
          %s369 = sand.u32 %s142, 1
          %s370 = scalar_lea.sflag [#allocation3], %s369
          %s371 = sand.u32 %s142, 1
          %s372 = smul.addr %s371, 8
          %s373 = scalar_lea.vmem [#allocation2], %s372
          %374 = dma.done %s370, 128
        $region48: #{concat_squash_linear.1} parent=43 // pred_fallthru
          _
      $region44: #{concat_squash_linear.1} parent=5 // pred_fallthru
        _
    $region6: #{concat_squash_linear.1} parent=1 // loop_footer
      %s17 = sadd.s32 1, %s13
    $region7: #{concat_squash_linear.1} parent=1 // loop_footer_branch
      %12 = sbr.rel target = $region3
    $region8: #{concat_squash_linear.1} parent=1 // loop_exit
      _
    %375 = vsyncpa [#allocation3], 1
    %s376 = scalar_lea.sflag [#allocation3], 1
    %377 = vsyncpa %s376, 1

</llo_original>
